<compile_context>
chip_gen: v7x
topology: tpu7x:2x2x1
jax: 0.10.0
libtpu: 0.0.40
codegen_flags: <defaults>
</compile_context>

<pallas_src>
import jax
import jax.numpy as jnp
from jax.experimental import pallas as pl
from jax.experimental.pallas import tpu as pltpu

U = 128          # segment width (== self.u in the torch module)
NUM_W = 3        # number of x0 rows (e.g. chemical elements)
S0 = 4           # segments of operand x0      (operands[-2].num_segments)
S1 = 4           # segments of operand x1      (operands[0].num_segments)
SOUT = 4         # segments of the output      (operands[-1].num_segments)
MAX_DEGREE = 3   # correlation = num_operands - 2, must be <= 6
Z = 16           # batch size (small test shape)


def make_paths(max_degree, s1, s0, sout, paths_per_degree=4):
    """Deterministic synthetic STP paths: (sorted x1 segs, x0 seg, out seg, coeff)."""
    paths = []
    c = 0
    for n in range(1, max_degree + 1):           # degree >= 1 (>= 3 operands)
        for p in range(paths_per_degree):
            # sorted: mirrors sort_indices_for_identical_operands over x1 copies
            ks = tuple(sorted(((p + 3 * k + n) % s1) for k in range(n)))
            jx0 = (p + n) % s0
            jout = (2 * p + n) % sout
            coeff = ((-1.0) ** c) * (0.5 + 0.125 * c)
            paths.append((ks, jx0, jout, float(coeff)))
            c += 1
    return tuple(paths)


PATHS = make_paths(MAX_DEGREE, S1, S0, SOUT)


def _group_paths(paths):
    """Group paths by (jx0, jout) and merge duplicate x1-index tuples.

    out[jout] += x0g[jx0] * sum_p coeff_p * prod_k x1[ks_p[k]]
    (distributivity; saves one multiply per path beyond the first in a group).
    """
    groups = {}
    for ks, jx0, jout, coeff in paths:
        merged = groups.setdefault((jx0, jout), {})
        merged[tuple(ks)] = merged.get(tuple(ks), 0.0) + float(coeff)
    return tuple(sorted(
        (key, tuple(sorted(merged.items()))) for key, merged in groups.items()
    ))


GROUPED = _group_paths(PATHS)


def _build_schedule(grouped):
    """jout-outermost static schedule + last-use table for CSE'd x1 products.

    Processing one output segment at a time lets the kernel keep a single
    accumulator live per jout (stored straight into o_ref), and the last-use
    table lets it drop partial-product cache entries as soon as they are dead,
    keeping the live set of (tb, U) temporaries small (no vreg/VMEM spills).
    """
    by_jout = {}
    for (jx0, jout), entries in grouped:
        by_jout.setdefault(jout, []).append((jx0, entries))
    sched = []
    for jout in range(SOUT):
        groups = by_jout.get(jout, [])
        # Adjacent groups share x1-product prefixes (sorted by index tuple).
        groups = tuple(sorted(groups, key=lambda g: tuple(ks for ks, _ in g[1])))
        sched.append((jout, groups))
    last_use, t = {}, 0
    for _, groups in sched:
        for _, entries in groups:
            for ks, _ in entries:
                for l in range(1, len(ks) + 1):
                    last_use[ks[:l]] = t
                t += 1
    return tuple(sched), last_use


SCHEDULE, LAST_USE = _build_schedule(GROUPED)

# Rough per-row op count for the CostEstimate (products + coeff/x0 muls + adds
# per path, plus the where-select gather per group).
_FLOPS_PER_ROW = U * (
    sum(len(ks) + 3 for ks, _, _, _ in PATHS)
    + (NUM_W - 1) * sum(len(groups) for _, groups in SCHEDULE)
)


def _stc_kernel(i0_ref, x1_ref, x0_ref, o_ref):
    """One batch tile: where-select x0 gather + CSE'd path product-accumulate."""
    tb = x1_ref.shape[0]
    i0 = i0_ref[...]                                    # (tb, 1) int32

    # Hoisted row-select masks (JAX does not CSE broadcasts, so build once).
    i0_b = jnp.broadcast_to(i0, (tb, U))                # (tb, U) int32
    sel = [i0_b == w for w in range(NUM_W - 1)]         # (tb, U) bool masks

    def x1_seg(j):                                      # zero-cost 128-aligned view
        return x1_ref[:, j * U:(j + 1) * U]

    def gather_x0(j):
        # True gather: nested where-select chain over the NUM_W weight rows.
        # NUM_W-1 selects per segment, no f32 mask casts, no 0*Inf NaN hazard.
        lo, hi = j * U, (j + 1) * U
        seg = x0_ref[NUM_W - 1:NUM_W, lo:hi]            # (1, U) default row
        if NUM_W == 1:
            return jnp.broadcast_to(seg, (tb, U))
        for w in range(NUM_W - 2, -1, -1):
            seg = jnp.where(sel[w], x0_ref[w:w + 1, lo:hi], seg)
        return seg                                      # (tb, U)

    # CSE of x1 partial products: sorted index tuples share prefixes, so
    # degree-2/3 paths reuse earlier products; cache entries are dropped right
    # after their statically-known last use.
    prod_cache = {}

    def get_prod(ks):
        p = prod_cache.get(ks)
        if p is None:
            p = x1_seg(ks[0]) if len(ks) == 1 else get_prod(ks[:-1]) * x1_seg(ks[-1])
            prod_cache[ks] = p
        return p

    t = 0
    for jout, groups in SCHEDULE:                       # static unroll
        lo, hi = jout * U, (jout + 1) * U
        acc = None
        for jx0, entries in groups:
            psum = None
            for ks, coeff in entries:
                term = get_prod(ks) * jnp.float32(coeff)
                psum = term if psum is None else psum + term
                for key in [k for k in prod_cache if LAST_USE[k] <= t]:
                    del prod_cache[key]                 # dead -> never reused
                t += 1
            term = gather_x0(jx0) * psum
            acc = term if acc is None else acc + term
        if acc is None:
            o_ref[:, lo:hi] = jnp.zeros((tb, U), o_ref.dtype)
        else:
            o_ref[:, lo:hi] = acc.astype(o_ref.dtype)   # unmasked, 128-aligned vst


def _pick_tb(z):
    # Big tiles amortize the ~0.35 us per-grid-step overhead (the kernel is
    # HBM-bound on v5e/v6e).  Cap at 2048 rows: double-buffered x1/out/i0
    # tiles (~18 MiB) plus ~10 MiB of live (tb, U) temporaries fit inside the
    # 48 MiB scoped-VMEM limit requested below (v7x physical VMEM is 64 MiB).
    # Keep >= 4 grid steps so each of v7x's 2 TensorCores gets >= 2 steps and
    # retains DMA/compute overlap.
    return max(8, min(2048, (z // 4) // 8 * 8))


@jax.jit
def symmetric_tensor_contraction(x0, i0, x1):
    """Mirrors CUDAKernel.forward(x0, i0, x1) -> (Z, SOUT * U), float32."""
    z = x1.shape[0]
    tb = _pick_tb(z)
    zp = pl.cdiv(z, tb) * tb
    i0 = i0.astype(jnp.int32)
    if zp != z:                       # pad ragged batch tail (i0=0 is valid)
        x1 = jnp.pad(x1, ((0, zp - z), (0, 0)))
        i0 = jnp.pad(i0, (0, zp - z))
    i0 = i0.reshape(zp, 1)

    grid_spec = pltpu.PrefetchScalarGridSpec(
        num_scalar_prefetch=0,
        grid=(zp // tb,),
        in_specs=[
            pl.BlockSpec((tb, 1), lambda b: (b, 0)),           # i0 batch tile
            pl.BlockSpec((tb, S1 * U), lambda b: (b, 0)),      # x1 batch tile
            # Full x0 table; constant (0, 0) block index across the grid so
            # the pipeline emitter elides its per-step re-DMA.
            pl.BlockSpec((NUM_W, S0 * U), lambda b: (0, 0)),
        ],
        out_specs=pl.BlockSpec((tb, SOUT * U), lambda b: (b, 0)),
    )
    cost = pl.CostEstimate(
        flops=zp * _FLOPS_PER_ROW,
        transcendentals=0,
        bytes_accessed=zp * ((S1 + SOUT) * U + 1) * 4 + NUM_W * S0 * U * 4,
    )
    out = pl.pallas_call(
        _stc_kernel,
        out_shape=jax.ShapeDtypeStruct((zp, SOUT * U), jnp.float32),
        grid_spec=grid_spec,
        compiler_params=pltpu.CompilerParams(
            dimension_semantics=("parallel",),
            vmem_limit_bytes=48 * 1024 * 1024,
        ),
        cost_estimate=cost,
    )(i0, x1, x0)
    return out[:z] if zp != z else out


def reference(x0, i0, x1):
    """Pure-JAX reference of the symmetric tensor contraction semantics."""
    z = x1.shape[0]
    x0g = x0[i0].reshape(z, S0, U)
    x1r = x1.reshape(z, S1, U)
    out = jnp.zeros((z, SOUT, U), jnp.float32)
    for ks, jx0, jout, coeff in PATHS:
        term = coeff * x0g[:, jx0, :]
        for jk in ks:
            term = term * x1r[:, jk, :]
        out = out.at[:, jout, :].add(term)
    return out.reshape(z, SOUT * U)


if __name__ == "__main__":
    key = jax.random.PRNGKey(0)
    k0, k1, k2 = jax.random.split(key, 3)
    x0 = jax.random.normal(k0, (NUM_W, S0 * U), jnp.float32)   # weight table
    x1 = jax.random.normal(k1, (Z, S1 * U), jnp.float32)       # per-sample features
    i0 = jax.random.randint(k2, (Z,), 0, NUM_W, jnp.int32)     # row index per sample

    out = symmetric_tensor_contraction(x0, i0, x1)
    jax.block_until_ready(out)

    ref = reference(x0, i0, x1)
    assert out.shape == (Z, SOUT * U), out.shape
    assert jnp.allclose(out, ref, atol=1e-4, rtol=1e-4), float(
        jnp.max(jnp.abs(out - ref))
    )
    print("KERNEL_OK")
</pallas_src>

<mosaic_0001>
module attributes {stable_mosaic.version = 11 : i64} {
  func.func @_stc_kernel(%arg0: i32, %arg1: memref<8x1xi32, #tpu.memory_space<vmem>>, %arg2: memref<8x512xf32, #tpu.memory_space<vmem>>, %arg3: memref<3x512xf32, #tpu.memory_space<vmem>>, %arg4: memref<8x512xf32, #tpu.memory_space<vmem>>) attributes {dimension_semantics = [#tpu.dimension_semantics<parallel>], iteration_bounds = array<i64: 2>, scalar_prefetch = 0 : i64, scratch_operands = 0 : i64, tpu.core_type = #tpu.core_type<tc>, window_params = [{transform_indices = @transform_0, window_bounds = array<i64: 8, 1>}, {transform_indices = @transform_1, window_bounds = array<i64: 8, 512>}, {pipeline_mode = #tpu.pipeline_mode<synchronous>, transform_indices = @transform_2, window_bounds = array<i64: 3, 512>}, {transform_indices = @transform_3, window_bounds = array<i64: 8, 512>}]} {
    %c0 = arith.constant 0 : index
    %c0_0 = arith.constant 0 : index
    %0 = vector.load %arg1[%c0, %c0_0] : memref<8x1xi32, #tpu.memory_space<vmem>>, vector<8x1xi32>
    %1 = vector.shape_cast %0 : vector<8x1xi32> to vector<8x1xi32>
    %2 = vector.broadcast %1 : vector<8x1xi32> to vector<8x128xi32>
    %c0_i32 = arith.constant 0 : i32
    %3 = vector.broadcast %c0_i32 : i32 to vector<8x128xi32>
    %4 = arith.cmpi eq, %2, %3 : vector<8x128xi32>
    %c1_i32 = arith.constant 1 : i32
    %5 = vector.broadcast %c1_i32 : i32 to vector<8x128xi32>
    %6 = arith.cmpi eq, %2, %5 : vector<8x128xi32>
    %c0_1 = arith.constant 0 : index
    %c0_2 = arith.constant 0 : index
    %7 = vector.load %arg2[%c0_1, %c0_2] : memref<8x512xf32, #tpu.memory_space<vmem>>, vector<8x128xf32>
    %c0_3 = arith.constant 0 : index
    %c128 = arith.constant 128 : index
    %8 = vector.load %arg2[%c0_3, %c128] : memref<8x512xf32, #tpu.memory_space<vmem>>, vector<8x128xf32>
    %9 = arith.mulf %7, %8 : vector<8x128xf32>
    %cst = arith.constant -1.375000e+00 : f32
    %10 = vector.broadcast %cst : f32 to vector<8x128xf32>
    %11 = arith.mulf %9, %10 : vector<8x128xf32>
    %c2 = arith.constant 2 : index
    %c128_4 = arith.constant 128 : index
    %12 = vector.load %arg3[%c2, %c128_4] : memref<3x512xf32, #tpu.memory_space<vmem>>, vector<1x128xf32>
    %c1 = arith.constant 1 : index
    %c128_5 = arith.constant 128 : index
    %13 = vector.load %arg3[%c1, %c128_5] : memref<3x512xf32, #tpu.memory_space<vmem>>, vector<1x128xf32>
    %14 = vector.shape_cast %13 : vector<1x128xf32> to vector<1x128xf32>
    %15 = vector.broadcast %14 : vector<1x128xf32> to vector<8x128xf32>
    %16 = vector.shape_cast %12 : vector<1x128xf32> to vector<1x128xf32>
    %17 = vector.broadcast %16 : vector<1x128xf32> to vector<8x128xf32>
    %18 = arith.select %6, %15, %17 : vector<8x128xi1>, vector<8x128xf32>
    %c0_6 = arith.constant 0 : index
    %c128_7 = arith.constant 128 : index
    %19 = vector.load %arg3[%c0_6, %c128_7] : memref<3x512xf32, #tpu.memory_space<vmem>>, vector<1x128xf32>
    %20 = vector.shape_cast %19 : vector<1x128xf32> to vector<1x128xf32>
    %21 = vector.broadcast %20 : vector<1x128xf32> to vector<8x128xf32>
    %22 = arith.select %4, %21, %18 : vector<8x128xi1>, vector<8x128xf32>
    %23 = arith.mulf %22, %11 : vector<8x128xf32>
    %c0_8 = arith.constant 0 : index
    %c256 = arith.constant 256 : index
    %24 = vector.load %arg2[%c0_8, %c256] : memref<8x512xf32, #tpu.memory_space<vmem>>, vector<8x128xf32>
    %c0_9 = arith.constant 0 : index
    %c384 = arith.constant 384 : index
    %25 = vector.load %arg2[%c0_9, %c384] : memref<8x512xf32, #tpu.memory_space<vmem>>, vector<8x128xf32>
    %26 = arith.mulf %24, %25 : vector<8x128xf32>
    %cst_10 = arith.constant -1.125000e+00 : f32
    %27 = vector.broadcast %cst_10 : f32 to vector<8x128xf32>
    %28 = arith.mulf %26, %27 : vector<8x128xf32>
    %c2_11 = arith.constant 2 : index
    %c384_12 = arith.constant 384 : index
    %29 = vector.load %arg3[%c2_11, %c384_12] : memref<3x512xf32, #tpu.memory_space<vmem>>, vector<1x128xf32>
    %c1_13 = arith.constant 1 : index
    %c384_14 = arith.constant 384 : index
    %30 = vector.load %arg3[%c1_13, %c384_14] : memref<3x512xf32, #tpu.memory_space<vmem>>, vector<1x128xf32>
    %31 = vector.shape_cast %30 : vector<1x128xf32> to vector<1x128xf32>
    %32 = vector.broadcast %31 : vector<1x128xf32> to vector<8x128xf32>
    %33 = vector.shape_cast %29 : vector<1x128xf32> to vector<1x128xf32>
    %34 = vector.broadcast %33 : vector<1x128xf32> to vector<8x128xf32>
    %35 = arith.select %6, %32, %34 : vector<8x128xi1>, vector<8x128xf32>
    %c0_15 = arith.constant 0 : index
    %c384_16 = arith.constant 384 : index
    %36 = vector.load %arg3[%c0_15, %c384_16] : memref<3x512xf32, #tpu.memory_space<vmem>>, vector<1x128xf32>
    %37 = vector.shape_cast %36 : vector<1x128xf32> to vector<1x128xf32>
    %38 = vector.broadcast %37 : vector<1x128xf32> to vector<8x128xf32>
    %39 = arith.select %4, %38, %35 : vector<8x128xi1>, vector<8x128xf32>
    %40 = arith.mulf %39, %28 : vector<8x128xf32>
    %41 = arith.addf %23, %40 : vector<8x128xf32>
    %c0_17 = arith.constant 0 : index
    %c0_18 = arith.constant 0 : index
    %42 = vector.load %arg4[%c0_17, %c0_18] : memref<8x512xf32, #tpu.memory_space<vmem>>, vector<8x128xf32>
    tpu.vector_store %arg4[%c0_17, %c0_18], %41 {strides = array<i32>} : memref<8x512xf32, #tpu.memory_space<vmem>>, vector<8x128xf32>,
    %c0_19 = arith.constant 0 : index
    %c256_20 = arith.constant 256 : index
    %43 = vector.load %arg2[%c0_19, %c256_20] : memref<8x512xf32, #tpu.memory_space<vmem>>, vector<8x128xf32>
    %44 = arith.mulf %9, %43 : vector<8x128xf32>
    %cst_21 = arith.constant -1.875000e+00 : f32
    %45 = vector.broadcast %cst_21 : f32 to vector<8x128xf32>
    %46 = arith.mulf %44, %45 : vector<8x128xf32>
    %c2_22 = arith.constant 2 : index
    %c256_23 = arith.constant 256 : index
    %47 = vector.load %arg3[%c2_22, %c256_23] : memref<3x512xf32, #tpu.memory_space<vmem>>, vector<1x128xf32>
    %c1_24 = arith.constant 1 : index
    %c256_25 = arith.constant 256 : index
    %48 = vector.load %arg3[%c1_24, %c256_25] : memref<3x512xf32, #tpu.memory_space<vmem>>, vector<1x128xf32>
    %49 = vector.shape_cast %48 : vector<1x128xf32> to vector<1x128xf32>
    %50 = vector.broadcast %49 : vector<1x128xf32> to vector<8x128xf32>
    %51 = vector.shape_cast %47 : vector<1x128xf32> to vector<1x128xf32>
    %52 = vector.broadcast %51 : vector<1x128xf32> to vector<8x128xf32>
    %53 = arith.select %6, %50, %52 : vector<8x128xi1>, vector<8x128xf32>
    %c0_26 = arith.constant 0 : index
    %c256_27 = arith.constant 256 : index
    %54 = vector.load %arg3[%c0_26, %c256_27] : memref<3x512xf32, #tpu.memory_space<vmem>>, vector<1x128xf32>
    %55 = vector.shape_cast %54 : vector<1x128xf32> to vector<1x128xf32>
    %56 = vector.broadcast %55 : vector<1x128xf32> to vector<8x128xf32>
    %57 = arith.select %4, %56, %53 : vector<8x128xi1>, vector<8x128xf32>
    %58 = arith.mulf %57, %46 : vector<8x128xf32>
    %c0_28 = arith.constant 0 : index
    %c256_29 = arith.constant 256 : index
    %59 = vector.load %arg2[%c0_28, %c256_29] : memref<8x512xf32, #tpu.memory_space<vmem>>, vector<8x128xf32>
    %60 = arith.mulf %7, %59 : vector<8x128xf32>
    %c0_30 = arith.constant 0 : index
    %c384_31 = arith.constant 384 : index
    %61 = vector.load %arg2[%c0_30, %c384_31] : memref<8x512xf32, #tpu.memory_space<vmem>>, vector<8x128xf32>
    %62 = arith.mulf %60, %61 : vector<8x128xf32>
    %cst_32 = arith.constant -1.625000e+00 : f32
    %63 = vector.broadcast %cst_32 : f32 to vector<8x128xf32>
    %64 = arith.mulf %62, %63 : vector<8x128xf32>
    %c2_33 = arith.constant 2 : index
    %c0_34 = arith.constant 0 : index
    %65 = vector.load %arg3[%c2_33, %c0_34] : memref<3x512xf32, #tpu.memory_space<vmem>>, vector<1x128xf32>
    %c1_35 = arith.constant 1 : index
    %c0_36 = arith.constant 0 : index
    %66 = vector.load %arg3[%c1_35, %c0_36] : memref<3x512xf32, #tpu.memory_space<vmem>>, vector<1x128xf32>
    %67 = vector.shape_cast %66 : vector<1x128xf32> to vector<1x128xf32>
    %68 = vector.broadcast %67 : vector<1x128xf32> to vector<8x128xf32>
    %69 = vector.shape_cast %65 : vector<1x128xf32> to vector<1x128xf32>
    %70 = vector.broadcast %69 : vector<1x128xf32> to vector<8x128xf32>
    %71 = arith.select %6, %68, %70 : vector<8x128xi1>, vector<8x128xf32>
    %c0_37 = arith.constant 0 : index
    %c0_38 = arith.constant 0 : index
    %72 = vector.load %arg3[%c0_37, %c0_38] : memref<3x512xf32, #tpu.memory_space<vmem>>, vector<1x128xf32>
    %73 = vector.shape_cast %72 : vector<1x128xf32> to vector<1x128xf32>
    %74 = vector.broadcast %73 : vector<1x128xf32> to vector<8x128xf32>
    %75 = arith.select %4, %74, %71 : vector<8x128xi1>, vector<8x128xf32>
    %76 = arith.mulf %75, %64 : vector<8x128xf32>
    %77 = arith.addf %58, %76 : vector<8x128xf32>
    %c0_39 = arith.constant 0 : index
    %c128_40 = arith.constant 128 : index
    %78 = vector.load %arg2[%c0_39, %c128_40] : memref<8x512xf32, #tpu.memory_space<vmem>>, vector<8x128xf32>
    %cst_41 = arith.constant 5.000000e-01 : f32
    %79 = vector.broadcast %cst_41 : f32 to vector<8x128xf32>
    %80 = arith.mulf %78, %79 : vector<8x128xf32>
    %c2_42 = arith.constant 2 : index
    %c128_43 = arith.constant 128 : index
    %81 = vector.load %arg3[%c2_42, %c128_43] : memref<3x512xf32, #tpu.memory_space<vmem>>, vector<1x128xf32>
    %c1_44 = arith.constant 1 : index
    %c128_45 = arith.constant 128 : index
    %82 = vector.load %arg3[%c1_44, %c128_45] : memref<3x512xf32, #tpu.memory_space<vmem>>, vector<1x128xf32>
    %83 = vector.shape_cast %82 : vector<1x128xf32> to vector<1x128xf32>
    %84 = vector.broadcast %83 : vector<1x128xf32> to vector<8x128xf32>
    %85 = vector.shape_cast %81 : vector<1x128xf32> to vector<1x128xf32>
    %86 = vector.broadcast %85 : vector<1x128xf32> to vector<8x128xf32>
    %87 = arith.select %6, %84, %86 : vector<8x128xi1>, vector<8x128xf32>
    %c0_46 = arith.constant 0 : index
    %c128_47 = arith.constant 128 : index
    %88 = vector.load %arg3[%c0_46, %c128_47] : memref<3x512xf32, #tpu.memory_space<vmem>>, vector<1x128xf32>
    %89 = vector.shape_cast %88 : vector<1x128xf32> to vector<1x128xf32>
    %90 = vector.broadcast %89 : vector<1x128xf32> to vector<8x128xf32>
    %91 = arith.select %4, %90, %87 : vector<8x128xi1>, vector<8x128xf32>
    %92 = arith.mulf %91, %80 : vector<8x128xf32>
    %93 = arith.addf %77, %92 : vector<8x128xf32>
    %c0_48 = arith.constant 0 : index
    %c384_49 = arith.constant 384 : index
    %94 = vector.load %arg2[%c0_48, %c384_49] : memref<8x512xf32, #tpu.memory_space<vmem>>, vector<8x128xf32>
    %cst_50 = arith.constant 7.500000e-01 : f32
    %95 = vector.broadcast %cst_50 : f32 to vector<8x128xf32>
    %96 = arith.mulf %94, %95 : vector<8x128xf32>
    %c2_51 = arith.constant 2 : index
    %c384_52 = arith.constant 384 : index
    %97 = vector.load %arg3[%c2_51, %c384_52] : memref<3x512xf32, #tpu.memory_space<vmem>>, vector<1x128xf32>
    %c1_53 = arith.constant 1 : index
    %c384_54 = arith.constant 384 : index
    %98 = vector.load %arg3[%c1_53, %c384_54] : memref<3x512xf32, #tpu.memory_space<vmem>>, vector<1x128xf32>
    %99 = vector.shape_cast %98 : vector<1x128xf32> to vector<1x128xf32>
    %100 = vector.broadcast %99 : vector<1x128xf32> to vector<8x128xf32>
    %101 = vector.shape_cast %97 : vector<1x128xf32> to vector<1x128xf32>
    %102 = vector.broadcast %101 : vector<1x128xf32> to vector<8x128xf32>
    %103 = arith.select %6, %100, %102 : vector<8x128xi1>, vector<8x128xf32>
    %c0_55 = arith.constant 0 : index
    %c384_56 = arith.constant 384 : index
    %104 = vector.load %arg3[%c0_55, %c384_56] : memref<3x512xf32, #tpu.memory_space<vmem>>, vector<1x128xf32>
    %105 = vector.shape_cast %104 : vector<1x128xf32> to vector<1x128xf32>
    %106 = vector.broadcast %105 : vector<1x128xf32> to vector<8x128xf32>
    %107 = arith.select %4, %106, %103 : vector<8x128xi1>, vector<8x128xf32>
    %108 = arith.mulf %107, %96 : vector<8x128xf32>
    %109 = arith.addf %93, %108 : vector<8x128xf32>
    %c0_57 = arith.constant 0 : index
    %c128_58 = arith.constant 128 : index
    %110 = vector.load %arg4[%c0_57, %c128_58] : memref<8x512xf32, #tpu.memory_space<vmem>>, vector<8x128xf32>
    tpu.vector_store %arg4[%c0_57, %c128_58], %109 {strides = array<i32>} : memref<8x512xf32, #tpu.memory_space<vmem>>, vector<8x128xf32>,
    %c0_59 = arith.constant 0 : index
    %c384_60 = arith.constant 384 : index
    %111 = vector.load %arg2[%c0_59, %c384_60] : memref<8x512xf32, #tpu.memory_space<vmem>>, vector<8x128xf32>
    %112 = arith.mulf %7, %111 : vector<8x128xf32>
    %cst_61 = arith.constant 1.250000e+00 : f32
    %113 = vector.broadcast %cst_61 : f32 to vector<8x128xf32>
    %114 = arith.mulf %112, %113 : vector<8x128xf32>
    %c2_62 = arith.constant 2 : index
    %c0_63 = arith.constant 0 : index
    %115 = vector.load %arg3[%c2_62, %c0_63] : memref<3x512xf32, #tpu.memory_space<vmem>>, vector<1x128xf32>
    %c1_64 = arith.constant 1 : index
    %c0_65 = arith.constant 0 : index
    %116 = vector.load %arg3[%c1_64, %c0_65] : memref<3x512xf32, #tpu.memory_space<vmem>>, vector<1x128xf32>
    %117 = vector.shape_cast %116 : vector<1x128xf32> to vector<1x128xf32>
    %118 = vector.broadcast %117 : vector<1x128xf32> to vector<8x128xf32>
    %119 = vector.shape_cast %115 : vector<1x128xf32> to vector<1x128xf32>
    %120 = vector.broadcast %119 : vector<1x128xf32> to vector<8x128xf32>
    %121 = arith.select %6, %118, %120 : vector<8x128xi1>, vector<8x128xf32>
    %c0_66 = arith.constant 0 : index
    %c0_67 = arith.constant 0 : index
    %122 = vector.load %arg3[%c0_66, %c0_67] : memref<3x512xf32, #tpu.memory_space<vmem>>, vector<1x128xf32>
    %123 = vector.shape_cast %122 : vector<1x128xf32> to vector<1x128xf32>
    %124 = vector.broadcast %123 : vector<1x128xf32> to vector<8x128xf32>
    %125 = arith.select %4, %124, %121 : vector<8x128xi1>, vector<8x128xf32>
    %126 = arith.mulf %125, %114 : vector<8x128xf32>
    %c0_68 = arith.constant 0 : index
    %c256_69 = arith.constant 256 : index
    %127 = vector.load %arg2[%c0_68, %c256_69] : memref<8x512xf32, #tpu.memory_space<vmem>>, vector<8x128xf32>
    %128 = arith.mulf %78, %127 : vector<8x128xf32>
    %cst_70 = arith.constant 1.000000e+00 : f32
    %129 = vector.broadcast %cst_70 : f32 to vector<8x128xf32>
    %130 = arith.mulf %128, %129 : vector<8x128xf32>
    %c2_71 = arith.constant 2 : index
    %c256_72 = arith.constant 256 : index
    %131 = vector.load %arg3[%c2_71, %c256_72] : memref<3x512xf32, #tpu.memory_space<vmem>>, vector<1x128xf32>
    %c1_73 = arith.constant 1 : index
    %c256_74 = arith.constant 256 : index
    %132 = vector.load %arg3[%c1_73, %c256_74] : memref<3x512xf32, #tpu.memory_space<vmem>>, vector<1x128xf32>
    %133 = vector.shape_cast %132 : vector<1x128xf32> to vector<1x128xf32>
    %134 = vector.broadcast %133 : vector<1x128xf32> to vector<8x128xf32>
    %135 = vector.shape_cast %131 : vector<1x128xf32> to vector<1x128xf32>
    %136 = vector.broadcast %135 : vector<1x128xf32> to vector<8x128xf32>
    %137 = arith.select %6, %134, %136 : vector<8x128xi1>, vector<8x128xf32>
    %c0_75 = arith.constant 0 : index
    %c256_76 = arith.constant 256 : index
    %138 = vector.load %arg3[%c0_75, %c256_76] : memref<3x512xf32, #tpu.memory_space<vmem>>, vector<1x128xf32>
    %139 = vector.shape_cast %138 : vector<1x128xf32> to vector<1x128xf32>
    %140 = vector.broadcast %139 : vector<1x128xf32> to vector<8x128xf32>
    %141 = arith.select %4, %140, %137 : vector<8x128xi1>, vector<8x128xf32>
    %142 = arith.mulf %141, %130 : vector<8x128xf32>
    %143 = arith.addf %126, %142 : vector<8x128xf32>
    %c0_77 = arith.constant 0 : index
    %c256_78 = arith.constant 256 : index
    %144 = vector.load %arg4[%c0_77, %c256_78] : memref<8x512xf32, #tpu.memory_space<vmem>>, vector<8x128xf32>
    tpu.vector_store %arg4[%c0_77, %c256_78], %143 {strides = array<i32>} : memref<8x512xf32, #tpu.memory_space<vmem>>, vector<8x128xf32>,
    %cst_79 = arith.constant -8.750000e-01 : f32
    %145 = vector.broadcast %cst_79 : f32 to vector<8x128xf32>
    %146 = arith.mulf %7, %145 : vector<8x128xf32>
    %c2_80 = arith.constant 2 : index
    %c0_81 = arith.constant 0 : index
    %147 = vector.load %arg3[%c2_80, %c0_81] : memref<3x512xf32, #tpu.memory_space<vmem>>, vector<1x128xf32>
    %c1_82 = arith.constant 1 : index
    %c0_83 = arith.constant 0 : index
    %148 = vector.load %arg3[%c1_82, %c0_83] : memref<3x512xf32, #tpu.memory_space<vmem>>, vector<1x128xf32>
    %149 = vector.shape_cast %148 : vector<1x128xf32> to vector<1x128xf32>
    %150 = vector.broadcast %149 : vector<1x128xf32> to vector<8x128xf32>
    %151 = vector.shape_cast %147 : vector<1x128xf32> to vector<1x128xf32>
    %152 = vector.broadcast %151 : vector<1x128xf32> to vector<8x128xf32>
    %153 = arith.select %6, %150, %152 : vector<8x128xi1>, vector<8x128xf32>
    %c0_84 = arith.constant 0 : index
    %c0_85 = arith.constant 0 : index
    %154 = vector.load %arg3[%c0_84, %c0_85] : memref<3x512xf32, #tpu.memory_space<vmem>>, vector<1x128xf32>
    %155 = vector.shape_cast %154 : vector<1x128xf32> to vector<1x128xf32>
    %156 = vector.broadcast %155 : vector<1x128xf32> to vector<8x128xf32>
    %157 = arith.select %4, %156, %153 : vector<8x128xi1>, vector<8x128xf32>
    %158 = arith.mulf %157, %146 : vector<8x128xf32>
    %c0_86 = arith.constant 0 : index
    %c384_87 = arith.constant 384 : index
    %159 = vector.load %arg2[%c0_86, %c384_87] : memref<8x512xf32, #tpu.memory_space<vmem>>, vector<8x128xf32>
    %160 = arith.mulf %9, %159 : vector<8x128xf32>
    %cst_88 = arith.constant 1.750000e+00 : f32
    %161 = vector.broadcast %cst_88 : f32 to vector<8x128xf32>
    %162 = arith.mulf %160, %161 : vector<8x128xf32>
    %c2_89 = arith.constant 2 : index
    %c128_90 = arith.constant 128 : index
    %163 = vector.load %arg3[%c2_89, %c128_90] : memref<3x512xf32, #tpu.memory_space<vmem>>, vector<1x128xf32>
    %c1_91 = arith.constant 1 : index
    %c128_92 = arith.constant 128 : index
    %164 = vector.load %arg3[%c1_91, %c128_92] : memref<3x512xf32, #tpu.memory_space<vmem>>, vector<1x128xf32>
    %165 = vector.shape_cast %164 : vector<1x128xf32> to vector<1x128xf32>
    %166 = vector.broadcast %165 : vector<1x128xf32> to vector<8x128xf32>
    %167 = vector.shape_cast %163 : vector<1x128xf32> to vector<1x128xf32>
    %168 = vector.broadcast %167 : vector<1x128xf32> to vector<8x128xf32>
    %169 = arith.select %6, %166, %168 : vector<8x128xi1>, vector<8x128xf32>
    %c0_93 = arith.constant 0 : index
    %c128_94 = arith.constant 128 : index
    %170 = vector.load %arg3[%c0_93, %c128_94] : memref<3x512xf32, #tpu.memory_space<vmem>>, vector<1x128xf32>
    %171 = vector.shape_cast %170 : vector<1x128xf32> to vector<1x128xf32>
    %172 = vector.broadcast %171 : vector<1x128xf32> to vector<8x128xf32>
    %173 = arith.select %4, %172, %169 : vector<8x128xi1>, vector<8x128xf32>
    %174 = arith.mulf %173, %162 : vector<8x128xf32>
    %175 = arith.addf %158, %174 : vector<8x128xf32>
    %c0_95 = arith.constant 0 : index
    %c384_96 = arith.constant 384 : index
    %176 = vector.load %arg2[%c0_95, %c384_96] : memref<8x512xf32, #tpu.memory_space<vmem>>, vector<8x128xf32>
    %177 = arith.mulf %128, %176 : vector<8x128xf32>
    %cst_97 = arith.constant 1.500000e+00 : f32
    %178 = vector.broadcast %cst_97 : f32 to vector<8x128xf32>
    %179 = arith.mulf %177, %178 : vector<8x128xf32>
    %c2_98 = arith.constant 2 : index
    %c384_99 = arith.constant 384 : index
    %180 = vector.load %arg3[%c2_98, %c384_99] : memref<3x512xf32, #tpu.memory_space<vmem>>, vector<1x128xf32>
    %c1_100 = arith.constant 1 : index
    %c384_101 = arith.constant 384 : index
    %181 = vector.load %arg3[%c1_100, %c384_101] : memref<3x512xf32, #tpu.memory_space<vmem>>, vector<1x128xf32>
    %182 = vector.shape_cast %181 : vector<1x128xf32> to vector<1x128xf32>
    %183 = vector.broadcast %182 : vector<1x128xf32> to vector<8x128xf32>
    %184 = vector.shape_cast %180 : vector<1x128xf32> to vector<1x128xf32>
    %185 = vector.broadcast %184 : vector<1x128xf32> to vector<8x128xf32>
    %186 = arith.select %6, %183, %185 : vector<8x128xi1>, vector<8x128xf32>
    %c0_102 = arith.constant 0 : index
    %c384_103 = arith.constant 384 : index
    %187 = vector.load %arg3[%c0_102, %c384_103] : memref<3x512xf32, #tpu.memory_space<vmem>>, vector<1x128xf32>
    %188 = vector.shape_cast %187 : vector<1x128xf32> to vector<1x128xf32>
    %189 = vector.broadcast %188 : vector<1x128xf32> to vector<8x128xf32>
    %190 = arith.select %4, %189, %186 : vector<8x128xi1>, vector<8x128xf32>
    %191 = arith.mulf %190, %179 : vector<8x128xf32>
    %192 = arith.addf %175, %191 : vector<8x128xf32>
    %cst_104 = arith.constant -6.250000e-01 : f32
    %193 = vector.broadcast %cst_104 : f32 to vector<8x128xf32>
    %194 = arith.mulf %24, %193 : vector<8x128xf32>
    %c2_105 = arith.constant 2 : index
    %c256_106 = arith.constant 256 : index
    %195 = vector.load %arg3[%c2_105, %c256_106] : memref<3x512xf32, #tpu.memory_space<vmem>>, vector<1x128xf32>
    %c1_107 = arith.constant 1 : index
    %c256_108 = arith.constant 256 : index
    %196 = vector.load %arg3[%c1_107, %c256_108] : memref<3x512xf32, #tpu.memory_space<vmem>>, vector<1x128xf32>
    %197 = vector.shape_cast %196 : vector<1x128xf32> to vector<1x128xf32>
    %198 = vector.broadcast %197 : vector<1x128xf32> to vector<8x128xf32>
    %199 = vector.shape_cast %195 : vector<1x128xf32> to vector<1x128xf32>
    %200 = vector.broadcast %199 : vector<1x128xf32> to vector<8x128xf32>
    %201 = arith.select %6, %198, %200 : vector<8x128xi1>, vector<8x128xf32>
    %c0_109 = arith.constant 0 : index
    %c256_110 = arith.constant 256 : index
    %202 = vector.load %arg3[%c0_109, %c256_110] : memref<3x512xf32, #tpu.memory_space<vmem>>, vector<1x128xf32>
    %203 = vector.shape_cast %202 : vector<1x128xf32> to vector<1x128xf32>
    %204 = vector.broadcast %203 : vector<1x128xf32> to vector<8x128xf32>
    %205 = arith.select %4, %204, %201 : vector<8x128xi1>, vector<8x128xf32>
    %206 = arith.mulf %205, %194 : vector<8x128xf32>
    %207 = arith.addf %192, %206 : vector<8x128xf32>
    %c0_111 = arith.constant 0 : index
    %c384_112 = arith.constant 384 : index
    %208 = vector.load %arg4[%c0_111, %c384_112] : memref<8x512xf32, #tpu.memory_space<vmem>>, vector<8x128xf32>
    tpu.vector_store %arg4[%c0_111, %c384_112], %207 {strides = array<i32>} : memref<8x512xf32, #tpu.memory_space<vmem>>, vector<8x128xf32>,
    return
  }
  func.func @transform_0(%arg0: i32) -> (i32, i32) {
    %c0_i32 = arith.constant 0 : i32
    %c0_i32_0 = arith.constant 0 : i32
    return %arg0, %c0_i32 : i32, i32
  }
  func.func @transform_1(%arg0: i32) -> (i32, i32) {
    %c0_i32 = arith.constant 0 : i32
    %c0_i32_0 = arith.constant 0 : i32
    return %arg0, %c0_i32 : i32, i32
  }
  func.func @transform_2(%arg0: i32) -> (i32, i32) {
    %c0_i32 = arith.constant 0 : i32
    %c0_i32_0 = arith.constant 0 : i32
    %c0_i32_1 = arith.constant 0 : i32
    return %c0_i32, %c0_i32_0 : i32, i32
  }
  func.func @transform_3(%arg0: i32) -> (i32, i32) {
    %c0_i32 = arith.constant 0 : i32
    %c0_i32_0 = arith.constant 0 : i32
    return %arg0, %c0_i32 : i32, i32
  }
}

</mosaic_0001>

<llo_original>
// kernel: symmetric_tensor_contraction.1
$region0: #{symmetric_tensor_contraction.1}
  #allocation0 [shape = 'u32[]', space=smem, size = 0x4, offset = 0x4, fixed_abs, tag = 'smem constant byte address 0x4 - core index']
  #allocation1 [shape = 'u32[144,128]{1,0:T(1,128)}', space=vmem, size = 0x12000, scoped, tag = 'internal scratch']
  %s0 = inlined_call_operand.vmem [shape: s32[16,1], index: 0, kind: input, shape index: {}]
  %s1 = inlined_call_operand.hbm [shape: f32[16,512], index: 1, kind: input, shape index: {}]
  %s2 = inlined_call_operand.vmem [shape: f32[3,512], index: 2, kind: input, shape index: {}]
  %s3 = inlined_call_operand.hbm [shape: f32[16,512], index: 3, kind: output, shape index: {}]
  %s4 = sld [smem:[#allocation0]]
  $region49: #{symmetric_tensor_contraction.1} parent=0
    _
  %s6 = ssub.s32 1, %s4
  %s7 = scalar_select 0, %s6, %s4
  $region1: #{symmetric_tensor_contraction.1} parent=0
    #allocation2 [shape = 'u8[32768]{0}', space=vmem, size = 0x8000, scoped, tag = 'input window, operand 1']
    #allocation3 [shape = 's32[2]{0}', space=sflag, size = 0x8, scoped, tag = 'scoped memory for symmetric_tensor_contraction.1']
    #allocation4 [shape = 's32[2]{0}', space=sflag, size = 0x8, scoped, tag = 'scoped memory for symmetric_tensor_contraction.1']
    #allocation5 [shape = 'u8[32768]{0}', space=vmem, size = 0x8000, scoped, tag = 'output window, operand 0']
    %8 = vsyncpa [#allocation3], 0
    %s9 = scalar_lea.sflag [#allocation3], 1
    %10 = vsyncpa %s9, 0
    %11 = vsyncpa [#allocation4], 0
    %s12 = scalar_lea.sflag [#allocation4], 1
    %13 = vsyncpa %s12, 0
    loop: start=0, step=1, limit=4
    $region2: #{symmetric_tensor_contraction.1} parent=1 // loop_pre_header
      _
    $region3: #{symmetric_tensor_contraction.1} parent=1 // loop_header
      %s15 = sphi 0, %s19
      %p16 = scmp.ge.s32.totalorder %s15, 4
      %s25 = sphi 0, %s27
      %s28 = sphi 0, %s25
      %s29 = sphi 0, %s28
      %s45 = sphi 0, %s29
      %s51 = sphi 0, %s53
      %s54 = sphi 0, %s51
      %s55 = sphi 0, %s54
      %s71 = sphi 0, %s55
      %s75 = sphi 0, %s75
      %s77 = sphi 0, %s75
      %s78 = sphi 0, %s77
      %s92 = sphi 0, %s78
      %s98 = sphi 0, %s100
      %s101 = sphi 0, %s98
      %s102 = sphi 0, %s101
      %s118 = sphi 0, %s102
    $region4: #{symmetric_tensor_contraction.1} parent=1 // loop_header_branch
      %18 = sbr.rel (%p16) target = $region8
    $region5: #{symmetric_tensor_contraction.1} parent=1 // loop_body
      %s20 = ssub.s32 %s15, 1
      %s21 = ssub.s32 %s15, 2
      %s22 = sadd.s32 %s15, 1
      %s23 = ssub.s32 %s15, %s22
      %p24 = scmp.eq.s32.totalorder %s23, 0
      %s26 = sadd.s32 %s25, 1
      %s27 = scalar_select %p24, %s25, %s26
      %p30 = pneg %p24
      %p31 = scmp.eq.s32.totalorder %s15, 1
      %p32 = por %p30, %p31
      %p33 = scmp.ne.s32.totalorder %s25, %s28
      %p34 = scmp.eq.s32.totalorder %s15, 0
      %p35 = por %p33, %p34
      %p36 = scmp.ne.s32.totalorder %s25, %s28
      %p37 = scmp.eq.s32.totalorder %s20, 1
      %p38 = por %p36, %p37
      %p39 = scmp.ne.s32.totalorder %s28, %s29
      %p40 = scmp.eq.s32.totalorder %s20, 0
      %p41 = por %p39, %p40
      %p42 = scmp.ne.s32.totalorder %s28, %s29
      %p43 = scmp.eq.s32.totalorder %s21, 1
      %p44 = por %p42, %p43
      %p46 = scmp.ne.s32.totalorder %s29, %s45
      %p47 = scmp.eq.s32.totalorder %s21, 0
      %p48 = por %p46, %p47
      %s49 = ssub.s32 %s15, %s22
      %p50 = scmp.eq.s32.totalorder %s49, 0
      %s52 = sadd.s32 %s51, 1
      %s53 = scalar_select %p50, %s51, %s52
      %p56 = pneg %p50
      %p57 = scmp.eq.s32.totalorder %s15, 1
      %p58 = por %p56, %p57
      %p59 = scmp.ne.s32.totalorder %s51, %s54
      %p60 = scmp.eq.s32.totalorder %s15, 0
      %p61 = por %p59, %p60
      %p62 = scmp.ne.s32.totalorder %s51, %s54
      %p63 = scmp.eq.s32.totalorder %s20, 1
      %p64 = por %p62, %p63
      %p65 = scmp.ne.s32.totalorder %s54, %s55
      %p66 = scmp.eq.s32.totalorder %s20, 0
      %p67 = por %p65, %p66
      %p68 = scmp.ne.s32.totalorder %s54, %s55
      %p69 = scmp.eq.s32.totalorder %s21, 1
      %p70 = por %p68, %p69
      %p72 = scmp.ne.s32.totalorder %s55, %s71
      %p73 = scmp.eq.s32.totalorder %s21, 0
      %p74 = por %p72, %p73
      %s76 = sadd.s32 %s75, 1
      %p79 = scmp.eq.s32.totalorder %s15, 1
      %p80 = scmp.ne.s32.totalorder %s75, %s77
      %p81 = scmp.eq.s32.totalorder %s15, 0
      %p82 = por %p80, %p81
      %p83 = scmp.ne.s32.totalorder %s75, %s77
      %p84 = scmp.eq.s32.totalorder %s20, 1
      %p85 = por %p83, %p84
      %p86 = scmp.ne.s32.totalorder %s77, %s78
      %p87 = scmp.eq.s32.totalorder %s20, 0
      %p88 = por %p86, %p87
      %p89 = scmp.ne.s32.totalorder %s77, %s78
      %p90 = scmp.eq.s32.totalorder %s21, 1
      %p91 = por %p89, %p90
      %p93 = scmp.ne.s32.totalorder %s78, %s92
      %p94 = scmp.eq.s32.totalorder %s21, 0
      %p95 = por %p93, %p94
      %s96 = ssub.s32 %s15, %s22
      %p97 = scmp.eq.s32.totalorder %s96, 0
      %s99 = sadd.s32 %s98, 1
      %s100 = scalar_select %p97, %s98, %s99
      %p103 = pneg %p97
      %p104 = scmp.eq.s32.totalorder %s15, 1
      %p105 = por %p103, %p104
      %p106 = scmp.ne.s32.totalorder %s98, %s101
      %p107 = scmp.eq.s32.totalorder %s15, 0
      %p108 = por %p106, %p107
      %p109 = scmp.ne.s32.totalorder %s98, %s101
      %p110 = scmp.eq.s32.totalorder %s20, 1
      %p111 = por %p109, %p110
      %p112 = scmp.ne.s32.totalorder %s101, %s102
      %p113 = scmp.eq.s32.totalorder %s20, 0
      %p114 = por %p112, %p113
      %p115 = scmp.ne.s32.totalorder %s101, %s102
      %p116 = scmp.eq.s32.totalorder %s21, 1
      %p117 = por %p115, %p116
      %p119 = scmp.ne.s32.totalorder %s102, %s118
      %p120 = scmp.eq.s32.totalorder %s21, 0
      %p121 = por %p119, %p120
      %p122 = scmp.le.s32.totalorder 1, %s15
      %p123 = scmp.lt.s32.totalorder %s15, 3
      %p124 = pnand %p122, %p123
      %p125 = pneg %p124
      // Predicated region
      $region9: #{symmetric_tensor_contraction.1} parent=5 // pred_check
        _
      $region10: #{symmetric_tensor_contraction.1} parent=5 // pred_check_branch
        %127 = sbr.rel (%p124) target = $region12
      $region11: #{symmetric_tensor_contraction.1} parent=5 // pred_region
        %s128 = ssub.s32 %s15, 1
        // Predicated region
        $region13: #{symmetric_tensor_contraction.1} parent=11 // pred_check
          %p129 = pneg %p88
        $region14: #{symmetric_tensor_contraction.1} parent=11 // pred_check_branch
          %131 = sbr.rel (%p129) target = $region16
        $region15: #{symmetric_tensor_contraction.1} parent=11 // pred_region
          _
        $region16: #{symmetric_tensor_contraction.1} parent=11 // pred_fallthru
          _
      $region12: #{symmetric_tensor_contraction.1} parent=5 // pred_fallthru
        _
      %p132 = scmp.lt.s32.totalorder %s15, 2
      // Predicated region
      $region17: #{symmetric_tensor_contraction.1} parent=5 // pred_check
        %p133 = pneg %p132
      $region18: #{symmetric_tensor_contraction.1} parent=5 // pred_check_branch
        %135 = sbr.rel (%p133) target = $region20
      $region19: #{symmetric_tensor_contraction.1} parent=5 // pred_region
        // Predicated region
        $region21: #{symmetric_tensor_contraction.1} parent=19 // pred_check
          %p136 = pneg %p35
        $region22: #{symmetric_tensor_contraction.1} parent=19 // pred_check_branch
          %138 = sbr.rel (%p136) target = $region24
        $region23: #{symmetric_tensor_contraction.1} parent=19 // pred_region
          %p139 = scmp.lt.s32.totalorder %s15, 1
          %s140 = scalar_select %p139, %s15, 1
          %s141 = smul.addr %s140, 8
          %s142 = scalar_lea.vmem %s0, %s141
        $region24: #{symmetric_tensor_contraction.1} parent=19 // pred_fallthru
          _
        // Predicated region
        $region25: #{symmetric_tensor_contraction.1} parent=19 // pred_check
          %p143 = pneg %p61
        $region26: #{symmetric_tensor_contraction.1} parent=19 // pred_check_branch
          %145 = sbr.rel (%p143) target = $region28
        $region27: #{symmetric_tensor_contraction.1} parent=19 // pred_region
          %s146 = sand.u32 %s51, 1
          %s147 = scalar_lea.sflag [#allocation3], %s146
          %s148 = sand.u32 %s51, 1
          %s149 = smul.addr %s148, 32
          %s150 = scalar_lea.vmem [#allocation2], %s149
          %s152 = ssub.s32 512, 512
          %153 = vsyncadd %s147, %s152
          %s154 = smul.addr %s15, 4
          %s155 = smul.addr %s154, 128
          %s156 = scalar_lea.hbm %s1, %s155
          %s158 = sshll.u32 %s150, 4
          %s159 = int_to_ptr.vmem [resolvable:$true] %s158
          %161 = dma.hbm_to_vmem [thread:$0]  %s156, 512, %s159, %s147
        $region28: #{symmetric_tensor_contraction.1} parent=19 // pred_fallthru
          _
      $region20: #{symmetric_tensor_contraction.1} parent=5 // pred_fallthru
        _
      %p162 = scmp.le.s32.totalorder 1, %s15
      %p163 = scmp.lt.s32.totalorder %s15, 3
      %p164 = pnand %p162, %p163
      %p165 = pneg %p164
      // Predicated region
      $region29: #{symmetric_tensor_contraction.1} parent=5 // pred_check
        _
      $region30: #{symmetric_tensor_contraction.1} parent=5 // pred_check_branch
        %167 = sbr.rel (%p164) target = $region32
      $region31: #{symmetric_tensor_contraction.1} parent=5 // pred_region
        %s168 = ssub.s32 %s15, 1
        %s169 = sand.u32 %s54, 1
        %s170 = scalar_lea.sflag [#allocation3], %s169
        %s171 = sand.u32 %s54, 1
        %s172 = smul.addr %s171, 32
        %s173 = scalar_lea.vmem [#allocation2], %s172
        // Predicated region
        $region33: #{symmetric_tensor_contraction.1} parent=31 // pred_check
          %p174 = pneg %p67
        $region34: #{symmetric_tensor_contraction.1} parent=31 // pred_check_branch
          %176 = sbr.rel (%p174) target = $region36
        $region35: #{symmetric_tensor_contraction.1} parent=31 // pred_region
          %177 = dma.done %s170, 512
        $region36: #{symmetric_tensor_contraction.1} parent=31 // pred_fallthru
          _
        %p178 = scmp.lt.s32.totalorder %s20, 1
        %s179 = scalar_select %p178, %s20, 1
        %s180 = smul.addr %s179, 8
        %s181 = scalar_lea.vmem %s0, %s180
        %p182 = pneg %p41
        %p183 = pneg %p38
        %s184 = sand.u32 %s54, 1
        %s185 = scalar_lea.sflag [#allocation3], %s184
        %s186 = sand.u32 %s54, 1
        %s187 = smul.addr %s186, 32
        %s188 = scalar_lea.vmem [#allocation2], %s187
        %p189 = pneg %p67
        %p190 = pneg %p64
        %p191 = pneg %p88
        %p192 = pneg %p85
        %p193 = pneg %p114
        %p194 = pneg %p111
        %s195 = sand.u32 %s101, 1
        %s196 = scalar_lea.sflag [#allocation4], %s195
        %s197 = sand.u32 %s101, 1
        %s198 = smul.addr %s197, 32
        %s199 = scalar_lea.vmem [#allocation5], %s198
        %p200 = scmp.lt.s32.totalorder %s20, 1
        %s201 = scalar_select %p200, %s20, 1
        %s202 = smul.addr %s201, 8
        %s203 = scalar_lea.vmem %s0, %s202
        %v204 = vld [vmem:[%s203] sm:$0xff]
        %205 = vset.pattern.permute.xlu0 0
        %206 = vperm.xlu0 %205, %v204
        %v207 = vpop.permute.xlu0 %206
        %vm208 = vcmp.eq.s32.totalorder %v207, 0
        %vm209 = vcmp.eq.s32.totalorder %v207, 1
        %v210 = vld [vmem:[%s173] sm:$0xff]
        %v211 = vld [vmem:[%s173 + $0x8] sm:$0xff]
        %v212 = vmul.f32 %v210, %v211
        %v213 = vmul.f32 %v212, -1.375
        %v214 = vld [vmem:[%s2 + $0x6] sm:$0x1]
        %v215 = vld [vmem:[%s2 + $0x5] sm:$0x1]
        %v216 = vlaneseq
        %v217 = vshrl.u32 %v216, 7
        %v218 = vsub.s32 0, %v217
        %v219 = vrot.slane %v215, %v218
        %v220 = vlaneseq
        %v221 = vshrl.u32 %v220, 7
        %v222 = vsub.s32 0, %v221
        %v223 = vrot.slane %v214, %v222
        %v224 = vsel %vm209, %v219, %v223
        %v225 = vld [vmem:[%s2 + $0x4] sm:$0x1]
        %v226 = vlaneseq
        %v227 = vshrl.u32 %v226, 7
        %v228 = vsub.s32 0, %v227
        %v229 = vrot.slane %v225, %v228
        %v230 = vsel %vm208, %v229, %v224
        %v231 = vmul.f32 %v230, %v213
        %v232 = vld [vmem:[%s173 + $0x10] sm:$0xff]
        %v233 = vld [vmem:[%s173 + $0x18] sm:$0xff]
        %v234 = vmul.f32 %v232, %v233
        %v235 = vmul.f32 %v234, -1.125
        %v236 = vld [vmem:[%s2 + $0xe] sm:$0x1]
        %v237 = vld [vmem:[%s2 + $0xd] sm:$0x1]
        %v238 = vlaneseq
        %v239 = vshrl.u32 %v238, 7
        %v240 = vsub.s32 0, %v239
        %v241 = vrot.slane %v237, %v240
        %v242 = vlaneseq
        %v243 = vshrl.u32 %v242, 7
        %v244 = vsub.s32 0, %v243
        %v245 = vrot.slane %v236, %v244
        %v246 = vsel %vm209, %v241, %v245
        %v247 = vld [vmem:[%s2 + $0xc] sm:$0x1]
        %v248 = vlaneseq
        %v249 = vshrl.u32 %v248, 7
        %v250 = vsub.s32 0, %v249
        %v251 = vrot.slane %v247, %v250
        %v252 = vsel %vm208, %v251, %v246
        %v253 = vmul.f32 %v252, %v235
        %v254 = vadd.f32 %v231, %v253
        %255 = vst [vmem:[%s199] sm:$0xff] %v254
        %v256 = vld [vmem:[%s173 + $0x10] sm:$0xff]
        %v257 = vmul.f32 %v212, %v256
        %v258 = vmul.f32 %v257, -1.875
        %v259 = vld [vmem:[%s2 + $0xa] sm:$0x1]
        %v260 = vld [vmem:[%s2 + $0x9] sm:$0x1]
        %v261 = vlaneseq
        %v262 = vshrl.u32 %v261, 7
        %v263 = vsub.s32 0, %v262
        %v264 = vrot.slane %v260, %v263
        %v265 = vlaneseq
        %v266 = vshrl.u32 %v265, 7
        %v267 = vsub.s32 0, %v266
        %v268 = vrot.slane %v259, %v267
        %v269 = vsel %vm209, %v264, %v268
        %v270 = vld [vmem:[%s2 + $0x8] sm:$0x1]
        %v271 = vlaneseq
        %v272 = vshrl.u32 %v271, 7
        %v273 = vsub.s32 0, %v272
        %v274 = vrot.slane %v270, %v273
        %v275 = vsel %vm208, %v274, %v269
        %v276 = vmul.f32 %v275, %v258
        %v277 = vmul.f32 %v210, %v256
        %v278 = vld [vmem:[%s173 + $0x18] sm:$0xff]
        %v279 = vmul.f32 %v277, %v278
        %v280 = vmul.f32 %v279, -1.625
        %v281 = vld [vmem:[%s2 + $0x2] sm:$0x1]
        %v282 = vld [vmem:[%s2 + $0x1] sm:$0x1]
        %v283 = vlaneseq
        %v284 = vshrl.u32 %v283, 7
        %v285 = vsub.s32 0, %v284
        %v286 = vrot.slane %v282, %v285
        %v287 = vlaneseq
        %v288 = vshrl.u32 %v287, 7
        %v289 = vsub.s32 0, %v288
        %v290 = vrot.slane %v281, %v289
        %v291 = vsel %vm209, %v286, %v290
        %v292 = vld [vmem:[%s2] sm:$0x1]
        %v293 = vlaneseq
        %v294 = vshrl.u32 %v293, 7
        %v295 = vsub.s32 0, %v294
        %v296 = vrot.slane %v292, %v295
        %v297 = vsel %vm208, %v296, %v291
        %v298 = vmul.f32 %v297, %v280
        %v299 = vadd.f32 %v276, %v298
        %v300 = vld [vmem:[%s173 + $0x8] sm:$0xff]
        %v301 = vmul.f32 %v300, 0.5
        %v302 = vld [vmem:[%s2 + $0x6] sm:$0x1]
        %v303 = vld [vmem:[%s2 + $0x5] sm:$0x1]
        %v304 = vlaneseq
        %v305 = vshrl.u32 %v304, 7
        %v306 = vsub.s32 0, %v305
        %v307 = vrot.slane %v303, %v306
        %v308 = vlaneseq
        %v309 = vshrl.u32 %v308, 7
        %v310 = vsub.s32 0, %v309
        %v311 = vrot.slane %v302, %v310
        %v312 = vsel %vm209, %v307, %v311
        %v313 = vld [vmem:[%s2 + $0x4] sm:$0x1]
        %v314 = vlaneseq
        %v315 = vshrl.u32 %v314, 7
        %v316 = vsub.s32 0, %v315
        %v317 = vrot.slane %v313, %v316
        %v318 = vsel %vm208, %v317, %v312
        %v319 = vmul.f32 %v318, %v301
        %v320 = vadd.f32 %v299, %v319
        %v321 = vmul.f32 %v278, 0.75
        %v322 = vld [vmem:[%s2 + $0xe] sm:$0x1]
        %v323 = vld [vmem:[%s2 + $0xd] sm:$0x1]
        %v324 = vlaneseq
        %v325 = vshrl.u32 %v324, 7
        %v326 = vsub.s32 0, %v325
        %v327 = vrot.slane %v323, %v326
        %v328 = vlaneseq
        %v329 = vshrl.u32 %v328, 7
        %v330 = vsub.s32 0, %v329
        %v331 = vrot.slane %v322, %v330
        %v332 = vsel %vm209, %v327, %v331
        %v333 = vld [vmem:[%s2 + $0xc] sm:$0x1]
        %v334 = vlaneseq
        %v335 = vshrl.u32 %v334, 7
        %v336 = vsub.s32 0, %v335
        %v337 = vrot.slane %v333, %v336
        %v338 = vsel %vm208, %v337, %v332
        %v339 = vmul.f32 %v338, %v321
        %v340 = vadd.f32 %v320, %v339
        %341 = vst [vmem:[%s199 + $0x8] sm:$0xff] %v340
        %v342 = vld [vmem:[%s173 + $0x18] sm:$0xff]
        %v343 = vmul.f32 %v210, %v342
        %v344 = vmul.f32 %v343, 1.25
        %v345 = vld [vmem:[%s2 + $0x2] sm:$0x1]
        %v346 = vld [vmem:[%s2 + $0x1] sm:$0x1]
        %v347 = vlaneseq
        %v348 = vshrl.u32 %v347, 7
        %v349 = vsub.s32 0, %v348
        %v350 = vrot.slane %v346, %v349
        %v351 = vlaneseq
        %v352 = vshrl.u32 %v351, 7
        %v353 = vsub.s32 0, %v352
        %v354 = vrot.slane %v345, %v353
        %v355 = vsel %vm209, %v350, %v354
        %v356 = vld [vmem:[%s2] sm:$0x1]
        %v357 = vlaneseq
        %v358 = vshrl.u32 %v357, 7
        %v359 = vsub.s32 0, %v358
        %v360 = vrot.slane %v356, %v359
        %v361 = vsel %vm208, %v360, %v355
        %v362 = vmul.f32 %v361, %v344
        %v363 = vld [vmem:[%s173 + $0x10] sm:$0xff]
        %v364 = vmul.f32 %v300, %v363
        %v365 = vld [vmem:[%s2 + $0xa] sm:$0x1]
        %v366 = vld [vmem:[%s2 + $0x9] sm:$0x1]
        %v367 = vlaneseq
        %v368 = vshrl.u32 %v367, 7
        %v369 = vsub.s32 0, %v368
        %v370 = vrot.slane %v366, %v369
        %v371 = vlaneseq
        %v372 = vshrl.u32 %v371, 7
        %v373 = vsub.s32 0, %v372
        %v374 = vrot.slane %v365, %v373
        %v375 = vsel %vm209, %v370, %v374
        %v376 = vld [vmem:[%s2 + $0x8] sm:$0x1]
        %v377 = vlaneseq
        %v378 = vshrl.u32 %v377, 7
        %v379 = vsub.s32 0, %v378
        %v380 = vrot.slane %v376, %v379
        %v381 = vsel %vm208, %v380, %v375
        %v382 = vmul.f32 %v381, %v364
        %v383 = vadd.f32 %v362, %v382
        %384 = vst [vmem:[%s199 + $0x10] sm:$0xff] %v383
        %v385 = vmul.f32 %v210, -0.875
        %v386 = vld [vmem:[%s2 + $0x2] sm:$0x1]
        %v387 = vld [vmem:[%s2 + $0x1] sm:$0x1]
        %v388 = vlaneseq
        %v389 = vshrl.u32 %v388, 7
        %v390 = vsub.s32 0, %v389
        %v391 = vrot.slane %v387, %v390
        %v392 = vlaneseq
        %v393 = vshrl.u32 %v392, 7
        %v394 = vsub.s32 0, %v393
        %v395 = vrot.slane %v386, %v394
        %v396 = vsel %vm209, %v391, %v395
        %v397 = vld [vmem:[%s2] sm:$0x1]
        %v398 = vlaneseq
        %v399 = vshrl.u32 %v398, 7
        %v400 = vsub.s32 0, %v399
        %v401 = vrot.slane %v397, %v400
        %v402 = vsel %vm208, %v401, %v396
        %v403 = vmul.f32 %v402, %v385
        %v404 = vld [vmem:[%s173 + $0x18] sm:$0xff]
        %v405 = vmul.f32 %v212, %v404
        %v406 = vmul.f32 %v405, 1.75
        %v407 = vld [vmem:[%s2 + $0x6] sm:$0x1]
        %v408 = vld [vmem:[%s2 + $0x5] sm:$0x1]
        %v409 = vlaneseq
        %v410 = vshrl.u32 %v409, 7
        %v411 = vsub.s32 0, %v410
        %v412 = vrot.slane %v408, %v411
        %v413 = vlaneseq
        %v414 = vshrl.u32 %v413, 7
        %v415 = vsub.s32 0, %v414
        %v416 = vrot.slane %v407, %v415
        %v417 = vsel %vm209, %v412, %v416
        %v418 = vld [vmem:[%s2 + $0x4] sm:$0x1]
        %v419 = vlaneseq
        %v420 = vshrl.u32 %v419, 7
        %v421 = vsub.s32 0, %v420
        %v422 = vrot.slane %v418, %v421
        %v423 = vsel %vm208, %v422, %v417
        %v424 = vmul.f32 %v423, %v406
        %v425 = vadd.f32 %v403, %v424
        %v426 = vmul.f32 %v364, %v404
        %v427 = vmul.f32 %v426, 1.5
        %v428 = vld [vmem:[%s2 + $0xe] sm:$0x1]
        %v429 = vld [vmem:[%s2 + $0xd] sm:$0x1]
        %v430 = vlaneseq
        %v431 = vshrl.u32 %v430, 7
        %v432 = vsub.s32 0, %v431
        %v433 = vrot.slane %v429, %v432
        %v434 = vlaneseq
        %v435 = vshrl.u32 %v434, 7
        %v436 = vsub.s32 0, %v435
        %v437 = vrot.slane %v428, %v436
        %v438 = vsel %vm209, %v433, %v437
        %v439 = vld [vmem:[%s2 + $0xc] sm:$0x1]
        %v440 = vlaneseq
        %v441 = vshrl.u32 %v440, 7
        %v442 = vsub.s32 0, %v441
        %v443 = vrot.slane %v439, %v442
        %v444 = vsel %vm208, %v443, %v438
        %v445 = vmul.f32 %v444, %v427
        %v446 = vadd.f32 %v425, %v445
        %v447 = vmul.f32 %v232, -0.625
        %v448 = vld [vmem:[%s2 + $0xa] sm:$0x1]
        %v449 = vld [vmem:[%s2 + $0x9] sm:$0x1]
        %v450 = vlaneseq
        %v451 = vshrl.u32 %v450, 7
        %v452 = vsub.s32 0, %v451
        %v453 = vrot.slane %v449, %v452
        %v454 = vlaneseq
        %v455 = vshrl.u32 %v454, 7
        %v456 = vsub.s32 0, %v455
        %v457 = vrot.slane %v448, %v456
        %v458 = vsel %vm209, %v453, %v457
        %v459 = vld [vmem:[%s2 + $0x8] sm:$0x1]
        %v460 = vlaneseq
        %v461 = vshrl.u32 %v460, 7
        %v462 = vsub.s32 0, %v461
        %v463 = vrot.slane %v459, %v462
        %v464 = vsel %vm208, %v463, %v458
        %v465 = vmul.f32 %v464, %v447
        %v466 = vadd.f32 %v446, %v465
        %467 = vst [vmem:[%s199 + $0x18] sm:$0xff] %v466
        %s468 = sand.u32 %s101, 1
        %s469 = scalar_lea.sflag [#allocation4], %s468
        %s470 = sand.u32 %s101, 1
        %s471 = smul.addr %s470, 32
        %s472 = scalar_lea.vmem [#allocation5], %s471
        // Predicated region
        $region37: #{symmetric_tensor_contraction.1} parent=31 // pred_check
          %p473 = pneg %p111
        $region38: #{symmetric_tensor_contraction.1} parent=31 // pred_check_branch
          %475 = sbr.rel (%p473) target = $region40
        $region39: #{symmetric_tensor_contraction.1} parent=31 // pred_region
          %s477 = ssub.s32 512, 512
          %478 = vsyncadd %s469, %s477
          %s479 = smul.addr %s20, 4
          %s480 = smul.addr %s479, 128
          %s481 = scalar_lea.hbm %s3, %s480
          %s483 = sshll.u32 %s472, 4
          %s484 = int_to_ptr.vmem [resolvable:$true] %s483
          %486 = dma.vmem_to_hbm [thread:$0]  %s484, 512, %s481, %s469
        $region40: #{symmetric_tensor_contraction.1} parent=31 // pred_fallthru
          _
      $region32: #{symmetric_tensor_contraction.1} parent=5 // pred_fallthru
        _
      %p487 = scmp.le.s32.totalorder 2, %s15
      // Predicated region
      $region41: #{symmetric_tensor_contraction.1} parent=5 // pred_check
        %p488 = pneg %p487
      $region42: #{symmetric_tensor_contraction.1} parent=5 // pred_check_branch
        %490 = sbr.rel (%p488) target = $region44
      $region43: #{symmetric_tensor_contraction.1} parent=5 // pred_region
        %s491 = ssub.s32 %s15, 2
        // Predicated region
        $region45: #{symmetric_tensor_contraction.1} parent=43 // pred_check
          %p492 = pneg %p117
        $region46: #{symmetric_tensor_contraction.1} parent=43 // pred_check_branch
          %494 = sbr.rel (%p492) target = $region48
        $region47: #{symmetric_tensor_contraction.1} parent=43 // pred_region
          %s495 = sand.u32 %s102, 1
          %s496 = scalar_lea.sflag [#allocation4], %s495
          %s497 = sand.u32 %s102, 1
          %s498 = smul.addr %s497, 32
          %s499 = scalar_lea.vmem [#allocation5], %s498
          %500 = dma.done %s496, 512
        $region48: #{symmetric_tensor_contraction.1} parent=43 // pred_fallthru
          _
      $region44: #{symmetric_tensor_contraction.1} parent=5 // pred_fallthru
        _
    $region6: #{symmetric_tensor_contraction.1} parent=1 // loop_footer
      %s19 = sadd.s32 1, %s15
    $region7: #{symmetric_tensor_contraction.1} parent=1 // loop_footer_branch
      %14 = sbr.rel target = $region3
    $region8: #{symmetric_tensor_contraction.1} parent=1 // loop_exit
      _
    %501 = vsyncpa [#allocation3], 1
    %s502 = scalar_lea.sflag [#allocation3], 1
    %503 = vsyncpa %s502, 1
    %504 = vsyncpa [#allocation4], 1
    %s505 = scalar_lea.sflag [#allocation4], 1
    %506 = vsyncpa %s505, 1

</llo_original>
